<compile_context>
chip_gen: v5e
topology: v5e:2x2
jax: 0.10.0
libtpu: 0.0.40
codegen_flags: <defaults>
</compile_context>

<pallas_src>
import functools

import jax
import jax.numpy as jnp
import numpy as np
from jax import lax
from jax.experimental import pallas as pl
from jax.experimental.pallas import tpu as pltpu

# bf16 only at the MXU dot inputs (safe on v5e/v6e/v7x); everything else f32.
MATMUL_DTYPE = jnp.bfloat16


def scam_kernel(saw_ref, alpha_ref, masks_ref, x_ref, w1_ref, w2_ref, wcat_ref,
                o_ref, *, W):
    x = x_ref[...]                                     # (Nb, C, HW) float32
    Nb, C, HW = x.shape

    # ---------------- channel attention (ca_layer) ----------------
    pooled = jnp.mean(x, axis=2)                                               # (Nb, C)
    hid = jnp.dot(pooled.astype(MATMUL_DTYPE), w1_ref[...],
                  preferred_element_type=jnp.float32)                          # (Nb, C//r)
    alpha = alpha_ref[0]
    hid = jnp.maximum(hid, 0.0) + alpha * jnp.minimum(hid, 0.0)                # PReLU (f32)
    ca_scale = jax.nn.sigmoid(
        jnp.dot(hid.astype(MATMUL_DTYPE), w2_ref[...],
                preferred_element_type=jnp.float32))                           # (Nb, C)

    # ---------------- spatial attention (spatial_attn_layer) ------
    max_map = jnp.max(x, axis=1)                                               # (Nb, HW)
    mean_map = jnp.mean(x, axis=1)                                             # (Nb, HW)
    masks = masks_ref[...]                                                     # (9, HW), host-built

    conv = jnp.zeros((Nb, HW), jnp.float32)
    for ky in range(3):
        dy = ky - 1
        for kx in range(3):
            dx = kx - 1
            t = ky * 3 + kx
            # weight[0, 0, ky, kx] * max_map + weight[0, 1, ky, kx] * mean_map
            comb = saw_ref[t] * max_map + saw_ref[9 + t] * mean_map            # (Nb, HW)
            d = dy * W + dx
            if d != 0:
                # shifted[i] = comb[i + d] (cyclic; wrap-around killed by tap mask)
                comb = pltpu.roll(comb, (-d) % HW, 1)
                comb = comb * masks[t][None, :]
            conv = conv + comb
    sa_scale = jax.nn.sigmoid(conv)                                            # (Nb, HW)

    # ------- concat([SA, CA]) -> 1x1 conv -> + residual, as ONE matmul -------
    # out = W_sa @ (x*sa) + W_ca @ (x*ca) + x = [W_sa | W_ca] @ [x*sa ; x*ca] + x
    sa_x = (x * sa_scale[:, None, :]).astype(MATMUL_DTYPE)                     # (Nb, C, HW)
    ca_x = (x * ca_scale[:, :, None]).astype(MATMUL_DTYPE)                     # (Nb, C, HW)
    x_cat = jnp.concatenate([sa_x, ca_x], axis=1)                              # (Nb, 2C, HW) bf16
    w_cat = wcat_ref[...]                                                      # (C, 2C) bf16

    if Nb == 1:
        # Plain 2-D dot: avoid a degenerate size-1 batched dot_general.
        y = jnp.dot(w_cat, x_cat[0], preferred_element_type=jnp.float32)[None]
    else:
        w_b = jnp.broadcast_to(w_cat[None], (Nb, C, 2 * C))
        y = jnp.einsum("nok,nkp->nop", w_b, x_cat,
                       preferred_element_type=jnp.float32)
    o_ref[...] = (y + x).astype(o_ref.dtype)                                   # residual in f32


def _vmem_capacity_bytes():
    try:
        cap = getattr(pltpu.get_tpu_info(), "vmem_capacity_bytes", None)
        if cap:
            return int(cap)
    except Exception:
        pass
    return 64 * 1024 * 1024          # conservative fallback: v7x per-TensorCore VMEM


def _pick_block_n(n, c, hw, vmem_bytes):
    """VMEM-budget-driven images per grid step.

    Roughly 10 f32 copies of one image block are live at once (in/out double
    buffers + in-kernel temporaries).  Prefer a grid of even length >= 2 so
    both v7x TensorCores get work; then take the largest block fitting budget.
    """
    per_image = 10 * c * hw * 4
    budget = max(per_image, vmem_bytes // 2)
    max_block = max(1, min(n, budget // per_image))
    divisors = [d for d in range(1, n + 1) if n % d == 0 and d <= max_block]
    even = [d for d in divisors if (n // d) >= 2 and (n // d) % 2 == 0]
    multi = [d for d in divisors if (n // d) >= 2]
    pool = even or multi or divisors
    return max(pool)


def _make_tap_masks(H, W):
    """Per-tap zero-padding masks for the 3x3 conv, evaluated at the OUTPUT
    pixel (applied after the roll). Row t = ky*3 + kx; center row stays ones."""
    HW = H * W
    pos = np.arange(HW)
    row, col = pos // W, pos % W
    not_top = (row > 0).astype(np.float32)
    not_bot = (row < H - 1).astype(np.float32)
    not_left = (col > 0).astype(np.float32)
    not_right = (col < W - 1).astype(np.float32)
    masks = np.ones((9, HW), np.float32)
    for ky in range(3):
        for kx in range(3):
            m = np.ones(HW, np.float32)
            if ky == 0:
                m *= not_top
            elif ky == 2:
                m *= not_bot
            if kx == 0:
                m *= not_left
            elif kx == 2:
                m *= not_right
            masks[ky * 3 + kx] = m
    return jnp.asarray(masks)


def scam_pallas(x_nchw, params, *, block_n=None):
    N, C, H, W = x_nchw.shape
    HW = H * W
    x = x_nchw.reshape(N, C, HW)     # free reshape: no transpose, no extra HBM pass
    Cr = params["w1"].shape[1]

    vmem_cap = _vmem_capacity_bytes()
    if block_n is None:
        block_n = _pick_block_n(N, C, HW, vmem_cap)
    assert N % block_n == 0
    # NOTE: for very large H*W (e.g. 128x128 RRDB feature maps on v7x) the next
    # step would be tiling H*W with a halo for the 3x3 conv; at these sizes the
    # VMEM-derived block_n keeps whole-image blocks resident.

    masks = _make_tap_masks(H, W)
    w1 = params["w1"].astype(MATMUL_DTYPE)                          # (C, Cr)
    w2 = params["w2"].astype(MATMUL_DTYPE)                          # (Cr, C)
    w_cat = jnp.concatenate([params["w_sa"], params["w_ca"]],
                            axis=1).astype(MATMUL_DTYPE)            # (C, 2C)

    per_step = (10 * block_n * C * HW * 4           # image-block working set
                + 9 * HW * 4                        # tap masks (resident)
                + (C * Cr + Cr * C + 2 * C * C) * 2 # bf16 weights
                + (1 << 16))                        # slack
    vmem_limit = int(min(vmem_cap, max(32 * 1024 * 1024, 2 * per_step)))

    kernel = functools.partial(scam_kernel, W=W)
    out = pl.pallas_call(
        kernel,
        out_shape=jax.ShapeDtypeStruct((N, C, HW), x.dtype),
        grid_spec=pltpu.PrefetchScalarGridSpec(
            num_scalar_prefetch=0,
            grid=(N // block_n,),
            in_specs=[
                pl.BlockSpec(memory_space=pltpu.MemorySpace.SMEM),    # SA 3x3 weights, flat (18,)
                pl.BlockSpec(memory_space=pltpu.MemorySpace.SMEM),    # PReLU alpha (1,)
                pl.BlockSpec((9, HW), lambda n: (0, 0)),              # boundary masks (resident)
                pl.BlockSpec((block_n, C, HW), lambda n: (n, 0, 0)),  # x (lane-dense on H*W)
                pl.BlockSpec((C, Cr), lambda n: (0, 0)),              # CA conv1 weight^T (C -> C//r)
                pl.BlockSpec((Cr, C), lambda n: (0, 0)),              # CA conv2 weight^T (C//r -> C)
                pl.BlockSpec((C, 2 * C), lambda n: (0, 0)),           # [W_sa | W_ca] (out, in)
            ],
            out_specs=pl.BlockSpec((block_n, C, HW), lambda n: (n, 0, 0)),
        ),
        compiler_params=pltpu.CompilerParams(
            dimension_semantics=("parallel",),
            vmem_limit_bytes=vmem_limit,
        ),
    )(params["sa_w_flat"], params["prelu_alpha"], masks, x, w1, w2, w_cat)
    return out.reshape(N, C, H, W)


def scam_reference(x_nchw, params):
    """Pure-JAX f32 reference mirroring the PyTorch forward (for validation)."""
    N, C, H, W = x_nchw.shape
    x = x_nchw
    # spatial attention
    mx = jnp.max(x, axis=1)                                               # (N, H, W)
    mn = jnp.mean(x, axis=1)
    comp = jnp.stack([mx, mn], axis=3)                                    # (N, H, W, 2)
    sa_w = params["sa_w_flat"].reshape(2, 3, 3)                           # [ci, ky, kx]
    sa_w_hwio = jnp.transpose(sa_w, (1, 2, 0))[:, :, :, None]             # (3, 3, 2, 1)
    conv = lax.conv_general_dilated(
        comp, sa_w_hwio, window_strides=(1, 1), padding="SAME",
        dimension_numbers=("NHWC", "HWIO", "NHWC"))[..., 0]               # (N, H, W)
    sa = x * jax.nn.sigmoid(conv)[:, None, :, :]
    # channel attention
    pooled = jnp.mean(x, axis=(2, 3))                                     # (N, C)
    hid = pooled @ params["w1"]
    a = params["prelu_alpha"][0]
    hid = jnp.maximum(hid, 0.0) + a * jnp.minimum(hid, 0.0)
    ca_scale = jax.nn.sigmoid(hid @ params["w2"])                         # (N, C)
    ca = x * ca_scale[:, :, None, None]
    # concat + 1x1 conv + residual
    out = (jnp.einsum("oc,nchw->nohw", params["w_sa"], sa)
           + jnp.einsum("oc,nchw->nohw", params["w_ca"], ca)
           + x)
    return out


def make_params(key, nf, reduction):
    cr = max(1, nf // reduction)
    k = jax.random.split(key, 5)
    return {
        # spatial_attn_layer: Conv2d(2, 1, 3, padding=1, bias=False), flat [ci*9 + ky*3 + kx]
        "sa_w_flat": 0.1 * jax.random.normal(k[0], (2 * 3 * 3,), jnp.float32),
        # nn.PReLU() default init
        "prelu_alpha": jnp.array([0.25], jnp.float32),
        # ca_layer convs (bias=False since SCAM passes bias=False), stored transposed
        "w1": 0.1 * jax.random.normal(k[1], (nf, cr), jnp.float32),
        "w2": 0.1 * jax.random.normal(k[2], (cr, nf), jnp.float32),
        # conv1x1 (2*nf -> nf, bias=False), split into SA half / CA half, (out, in) order
        "w_sa": 0.1 * jax.random.normal(k[3], (nf, nf), jnp.float32),
        "w_ca": 0.1 * jax.random.normal(k[4], (nf, nf), jnp.float32),
    }


if __name__ == "__main__":
    N, nf, H, W = 2, 48, 16, 16
    reduction = 24                                 # nf // reduction = 2
    key = jax.random.PRNGKey(0)
    kx, kp = jax.random.split(key)
    x = jax.random.normal(kx, (N, nf, H, W), jnp.float32)   # NCHW, like PyTorch
    params = make_params(kp, nf, reduction)

    out = jax.block_until_ready(scam_pallas(x, params))
    ref = jax.block_until_ready(scam_reference(x, params))
    # Tolerance sized for bf16 MXU inputs with f32 accumulation.
    np.testing.assert_allclose(np.asarray(out), np.asarray(ref), rtol=3e-2, atol=3e-2)
    print("KERNEL_OK")
</pallas_src>

<mosaic_0001>
module attributes {stable_mosaic.version = 11 : i64} {
  func.func @scam_kernel(%arg0: i32, %arg1: memref<18xf32, #tpu.memory_space<smem>>, %arg2: memref<1xf32, #tpu.memory_space<smem>>, %arg3: memref<9x256xf32, #tpu.memory_space<vmem>>, %arg4: memref<1x48x256xf32, #tpu.memory_space<vmem>>, %arg5: memref<48x2xbf16, #tpu.memory_space<vmem>>, %arg6: memref<2x48xbf16, #tpu.memory_space<vmem>>, %arg7: memref<48x96xbf16, #tpu.memory_space<vmem>>, %arg8: memref<1x48x256xf32, #tpu.memory_space<vmem>>) attributes {dimension_semantics = [#tpu.dimension_semantics<parallel>], iteration_bounds = array<i64: 2>, scalar_prefetch = 0 : i64, scratch_operands = 0 : i64, tpu.core_type = #tpu.core_type<tc>, window_params = [{transform_indices = @transform_0, window_bounds = array<i64: 18>}, {transform_indices = @transform_1, window_bounds = array<i64: 1>}, {pipeline_mode = #tpu.pipeline_mode<synchronous>, transform_indices = @transform_2, window_bounds = array<i64: 9, 256>}, {transform_indices = @transform_3, window_bounds = array<i64: 1, 48, 256>}, {pipeline_mode = #tpu.pipeline_mode<synchronous>, transform_indices = @transform_4, window_bounds = array<i64: 48, 2>}, {pipeline_mode = #tpu.pipeline_mode<synchronous>, transform_indices = @transform_5, window_bounds = array<i64: 2, 48>}, {pipeline_mode = #tpu.pipeline_mode<synchronous>, transform_indices = @transform_6, window_bounds = array<i64: 48, 96>}, {transform_indices = @transform_7, window_bounds = array<i64: 1, 48, 256>}]} {
    %c0 = arith.constant 0 : index
    %c0_0 = arith.constant 0 : index
    %c0_1 = arith.constant 0 : index
    %0 = vector.load %arg4[%c0, %c0_0, %c0_1] : memref<1x48x256xf32, #tpu.memory_space<vmem>>, vector<1x48x256xf32>
    %cst = arith.constant dense<0.000000e+00> : vector<1x48xf32>
    %1 = vector.multi_reduction <add>, %0, %cst [2] : vector<1x48x256xf32> to vector<1x48xf32>
    %cst_2 = arith.constant 2.560000e+02 : f32
    %2 = vector.broadcast %cst_2 : f32 to vector<1x48xf32>
    %3 = arith.divf %1, %2 : vector<1x48xf32>
    %4 = arith.truncf %3 : vector<1x48xf32> to vector<1x48xbf16>
    %c0_3 = arith.constant 0 : index
    %c0_4 = arith.constant 0 : index
    %5 = vector.load %arg5[%c0_3, %c0_4] : memref<48x2xbf16, #tpu.memory_space<vmem>>, vector<48x2xbf16>
    %cst_5 = arith.constant dense<0.000000e+00> : vector<1x2xf32>
    %6 = tpu.matmul %4, %5, %cst_5 {dimension_numbers = #tpu.dot_dimension_numbers<[1], [0], [0], [1], [0, 0, 1, 1], [], []>} : vector<1x48xbf16>, vector<48x2xbf16>, vector<1x2xf32> -> vector<1x2xf32>
    %c0_6 = arith.constant 0 : index
    %7 = memref.load %arg2[%c0_6] : memref<1xf32, #tpu.memory_space<smem>>
    %cst_7 = arith.constant 0.000000e+00 : f32
    %8 = vector.broadcast %cst_7 : f32 to vector<1x2xf32>
    %9 = arith.maximumf %6, %8 : vector<1x2xf32>
    %cst_8 = arith.constant 0.000000e+00 : f32
    %10 = vector.broadcast %cst_8 : f32 to vector<1x2xf32>
    %11 = arith.minimumf %6, %10 : vector<1x2xf32>
    %12 = vector.broadcast %7 : f32 to vector<1x2xf32>
    %13 = arith.mulf %12, %11 : vector<1x2xf32>
    %14 = arith.addf %9, %13 : vector<1x2xf32>
    %15 = arith.truncf %14 : vector<1x2xf32> to vector<1x2xbf16>
    %c0_9 = arith.constant 0 : index
    %c0_10 = arith.constant 0 : index
    %16 = vector.load %arg6[%c0_9, %c0_10] : memref<2x48xbf16, #tpu.memory_space<vmem>>, vector<2x48xbf16>
    %cst_11 = arith.constant dense<0.000000e+00> : vector<1x48xf32>
    %17 = tpu.matmul %15, %16, %cst_11 {dimension_numbers = #tpu.dot_dimension_numbers<[1], [0], [0], [1], [0, 0, 1, 1], [], []>} : vector<1x2xbf16>, vector<2x48xbf16>, vector<1x48xf32> -> vector<1x48xf32>
    %18 = arith.negf %17 : vector<1x48xf32>
    %19 = math.exp %18 : vector<1x48xf32>
    %cst_12 = arith.constant 1.000000e+00 : f32
    %20 = vector.broadcast %cst_12 : f32 to vector<1x48xf32>
    %21 = arith.addf %20, %19 : vector<1x48xf32>
    %22 = arith.divf %20, %21 : vector<1x48xf32>
    %cst_13 = arith.constant dense<0xFF800000> : vector<1x256xf32>
    %23 = vector.multi_reduction <maximumf>, %0, %cst_13 [1] : vector<1x48x256xf32> to vector<1x256xf32>
    %cst_14 = arith.constant dense<0.000000e+00> : vector<1x256xf32>
    %24 = vector.multi_reduction <add>, %0, %cst_14 [1] : vector<1x48x256xf32> to vector<1x256xf32>
    %cst_15 = arith.constant 4.800000e+01 : f32
    %25 = vector.broadcast %cst_15 : f32 to vector<1x256xf32>
    %26 = arith.divf %24, %25 : vector<1x256xf32>
    %c0_16 = arith.constant 0 : index
    %c0_17 = arith.constant 0 : index
    %27 = vector.load %arg3[%c0_16, %c0_17] : memref<9x256xf32, #tpu.memory_space<vmem>>, vector<9x256xf32>
    %cst_18 = arith.constant 0.000000e+00 : f32
    %28 = vector.broadcast %cst_18 : f32 to vector<1x256xf32>
    %c0_19 = arith.constant 0 : index
    %29 = memref.load %arg1[%c0_19] : memref<18xf32, #tpu.memory_space<smem>>
    %30 = vector.broadcast %29 : f32 to vector<1x256xf32>
    %31 = arith.mulf %30, %23 : vector<1x256xf32>
    %c9 = arith.constant 9 : index
    %32 = memref.load %arg1[%c9] : memref<18xf32, #tpu.memory_space<smem>>
    %33 = vector.broadcast %32 : f32 to vector<1x256xf32>
    %34 = arith.mulf %33, %26 : vector<1x256xf32>
    %35 = arith.addf %31, %34 : vector<1x256xf32>
    %c17_i32 = arith.constant 17 : i32
    %36 = tpu.dynamic_rotate %35 by %c17_i32 dim 1 : vector<1x256xf32>, i32 -> vector<1x256xf32>
    %37 = vector.extract_strided_slice %27 {offsets = [0, 0], sizes = [1, 256], strides = [1, 1]} : vector<9x256xf32> to vector<1x256xf32>
    %38 = vector.shape_cast %37 : vector<1x256xf32> to vector<256xf32>
    %39 = vector.shape_cast %38 : vector<256xf32> to vector<1x256xf32>
    %40 = arith.mulf %36, %39 : vector<1x256xf32>
    %41 = arith.addf %28, %40 : vector<1x256xf32>
    %c1 = arith.constant 1 : index
    %42 = memref.load %arg1[%c1] : memref<18xf32, #tpu.memory_space<smem>>
    %43 = vector.broadcast %42 : f32 to vector<1x256xf32>
    %44 = arith.mulf %43, %23 : vector<1x256xf32>
    %c10 = arith.constant 10 : index
    %45 = memref.load %arg1[%c10] : memref<18xf32, #tpu.memory_space<smem>>
    %46 = vector.broadcast %45 : f32 to vector<1x256xf32>
    %47 = arith.mulf %46, %26 : vector<1x256xf32>
    %48 = arith.addf %44, %47 : vector<1x256xf32>
    %c16_i32 = arith.constant 16 : i32
    %49 = tpu.dynamic_rotate %48 by %c16_i32 dim 1 : vector<1x256xf32>, i32 -> vector<1x256xf32>
    %50 = vector.extract_strided_slice %27 {offsets = [1, 0], sizes = [1, 256], strides = [1, 1]} : vector<9x256xf32> to vector<1x256xf32>
    %51 = vector.shape_cast %50 : vector<1x256xf32> to vector<256xf32>
    %52 = vector.shape_cast %51 : vector<256xf32> to vector<1x256xf32>
    %53 = arith.mulf %49, %52 : vector<1x256xf32>
    %54 = arith.addf %41, %53 : vector<1x256xf32>
    %c2 = arith.constant 2 : index
    %55 = memref.load %arg1[%c2] : memref<18xf32, #tpu.memory_space<smem>>
    %56 = vector.broadcast %55 : f32 to vector<1x256xf32>
    %57 = arith.mulf %56, %23 : vector<1x256xf32>
    %c11 = arith.constant 11 : index
    %58 = memref.load %arg1[%c11] : memref<18xf32, #tpu.memory_space<smem>>
    %59 = vector.broadcast %58 : f32 to vector<1x256xf32>
    %60 = arith.mulf %59, %26 : vector<1x256xf32>
    %61 = arith.addf %57, %60 : vector<1x256xf32>
    %c15_i32 = arith.constant 15 : i32
    %62 = tpu.dynamic_rotate %61 by %c15_i32 dim 1 : vector<1x256xf32>, i32 -> vector<1x256xf32>
    %63 = vector.extract_strided_slice %27 {offsets = [2, 0], sizes = [1, 256], strides = [1, 1]} : vector<9x256xf32> to vector<1x256xf32>
    %64 = vector.shape_cast %63 : vector<1x256xf32> to vector<256xf32>
    %65 = vector.shape_cast %64 : vector<256xf32> to vector<1x256xf32>
    %66 = arith.mulf %62, %65 : vector<1x256xf32>
    %67 = arith.addf %54, %66 : vector<1x256xf32>
    %c3 = arith.constant 3 : index
    %68 = memref.load %arg1[%c3] : memref<18xf32, #tpu.memory_space<smem>>
    %69 = vector.broadcast %68 : f32 to vector<1x256xf32>
    %70 = arith.mulf %69, %23 : vector<1x256xf32>
    %c12 = arith.constant 12 : index
    %71 = memref.load %arg1[%c12] : memref<18xf32, #tpu.memory_space<smem>>
    %72 = vector.broadcast %71 : f32 to vector<1x256xf32>
    %73 = arith.mulf %72, %26 : vector<1x256xf32>
    %74 = arith.addf %70, %73 : vector<1x256xf32>
    %c1_i32 = arith.constant 1 : i32
    %75 = tpu.dynamic_rotate %74 by %c1_i32 dim 1 : vector<1x256xf32>, i32 -> vector<1x256xf32>
    %76 = vector.extract_strided_slice %27 {offsets = [3, 0], sizes = [1, 256], strides = [1, 1]} : vector<9x256xf32> to vector<1x256xf32>
    %77 = vector.shape_cast %76 : vector<1x256xf32> to vector<256xf32>
    %78 = vector.shape_cast %77 : vector<256xf32> to vector<1x256xf32>
    %79 = arith.mulf %75, %78 : vector<1x256xf32>
    %80 = arith.addf %67, %79 : vector<1x256xf32>
    %c4 = arith.constant 4 : index
    %81 = memref.load %arg1[%c4] : memref<18xf32, #tpu.memory_space<smem>>
    %82 = vector.broadcast %81 : f32 to vector<1x256xf32>
    %83 = arith.mulf %82, %23 : vector<1x256xf32>
    %c13 = arith.constant 13 : index
    %84 = memref.load %arg1[%c13] : memref<18xf32, #tpu.memory_space<smem>>
    %85 = vector.broadcast %84 : f32 to vector<1x256xf32>
    %86 = arith.mulf %85, %26 : vector<1x256xf32>
    %87 = arith.addf %83, %86 : vector<1x256xf32>
    %88 = arith.addf %80, %87 : vector<1x256xf32>
    %c5 = arith.constant 5 : index
    %89 = memref.load %arg1[%c5] : memref<18xf32, #tpu.memory_space<smem>>
    %90 = vector.broadcast %89 : f32 to vector<1x256xf32>
    %91 = arith.mulf %90, %23 : vector<1x256xf32>
    %c14 = arith.constant 14 : index
    %92 = memref.load %arg1[%c14] : memref<18xf32, #tpu.memory_space<smem>>
    %93 = vector.broadcast %92 : f32 to vector<1x256xf32>
    %94 = arith.mulf %93, %26 : vector<1x256xf32>
    %95 = arith.addf %91, %94 : vector<1x256xf32>
    %c255_i32 = arith.constant 255 : i32
    %96 = tpu.dynamic_rotate %95 by %c255_i32 dim 1 : vector<1x256xf32>, i32 -> vector<1x256xf32>
    %97 = vector.extract_strided_slice %27 {offsets = [5, 0], sizes = [1, 256], strides = [1, 1]} : vector<9x256xf32> to vector<1x256xf32>
    %98 = vector.shape_cast %97 : vector<1x256xf32> to vector<256xf32>
    %99 = vector.shape_cast %98 : vector<256xf32> to vector<1x256xf32>
    %100 = arith.mulf %96, %99 : vector<1x256xf32>
    %101 = arith.addf %88, %100 : vector<1x256xf32>
    %c6 = arith.constant 6 : index
    %102 = memref.load %arg1[%c6] : memref<18xf32, #tpu.memory_space<smem>>
    %103 = vector.broadcast %102 : f32 to vector<1x256xf32>
    %104 = arith.mulf %103, %23 : vector<1x256xf32>
    %c15 = arith.constant 15 : index
    %105 = memref.load %arg1[%c15] : memref<18xf32, #tpu.memory_space<smem>>
    %106 = vector.broadcast %105 : f32 to vector<1x256xf32>
    %107 = arith.mulf %106, %26 : vector<1x256xf32>
    %108 = arith.addf %104, %107 : vector<1x256xf32>
    %c241_i32 = arith.constant 241 : i32
    %109 = tpu.dynamic_rotate %108 by %c241_i32 dim 1 : vector<1x256xf32>, i32 -> vector<1x256xf32>
    %110 = vector.extract_strided_slice %27 {offsets = [6, 0], sizes = [1, 256], strides = [1, 1]} : vector<9x256xf32> to vector<1x256xf32>
    %111 = vector.shape_cast %110 : vector<1x256xf32> to vector<256xf32>
    %112 = vector.shape_cast %111 : vector<256xf32> to vector<1x256xf32>
    %113 = arith.mulf %109, %112 : vector<1x256xf32>
    %114 = arith.addf %101, %113 : vector<1x256xf32>
    %c7 = arith.constant 7 : index
    %115 = memref.load %arg1[%c7] : memref<18xf32, #tpu.memory_space<smem>>
    %116 = vector.broadcast %115 : f32 to vector<1x256xf32>
    %117 = arith.mulf %116, %23 : vector<1x256xf32>
    %c16 = arith.constant 16 : index
    %118 = memref.load %arg1[%c16] : memref<18xf32, #tpu.memory_space<smem>>
    %119 = vector.broadcast %118 : f32 to vector<1x256xf32>
    %120 = arith.mulf %119, %26 : vector<1x256xf32>
    %121 = arith.addf %117, %120 : vector<1x256xf32>
    %c240_i32 = arith.constant 240 : i32
    %122 = tpu.dynamic_rotate %121 by %c240_i32 dim 1 : vector<1x256xf32>, i32 -> vector<1x256xf32>
    %123 = vector.extract_strided_slice %27 {offsets = [7, 0], sizes = [1, 256], strides = [1, 1]} : vector<9x256xf32> to vector<1x256xf32>
    %124 = vector.shape_cast %123 : vector<1x256xf32> to vector<256xf32>
    %125 = vector.shape_cast %124 : vector<256xf32> to vector<1x256xf32>
    %126 = arith.mulf %122, %125 : vector<1x256xf32>
    %127 = arith.addf %114, %126 : vector<1x256xf32>
    %c8 = arith.constant 8 : index
    %128 = memref.load %arg1[%c8] : memref<18xf32, #tpu.memory_space<smem>>
    %129 = vector.broadcast %128 : f32 to vector<1x256xf32>
    %130 = arith.mulf %129, %23 : vector<1x256xf32>
    %c17 = arith.constant 17 : index
    %131 = memref.load %arg1[%c17] : memref<18xf32, #tpu.memory_space<smem>>
    %132 = vector.broadcast %131 : f32 to vector<1x256xf32>
    %133 = arith.mulf %132, %26 : vector<1x256xf32>
    %134 = arith.addf %130, %133 : vector<1x256xf32>
    %c239_i32 = arith.constant 239 : i32
    %135 = tpu.dynamic_rotate %134 by %c239_i32 dim 1 : vector<1x256xf32>, i32 -> vector<1x256xf32>
    %136 = vector.extract_strided_slice %27 {offsets = [8, 0], sizes = [1, 256], strides = [1, 1]} : vector<9x256xf32> to vector<1x256xf32>
    %137 = vector.shape_cast %136 : vector<1x256xf32> to vector<256xf32>
    %138 = vector.shape_cast %137 : vector<256xf32> to vector<1x256xf32>
    %139 = arith.mulf %135, %138 : vector<1x256xf32>
    %140 = arith.addf %127, %139 : vector<1x256xf32>
    %141 = arith.negf %140 : vector<1x256xf32>
    %142 = math.exp %141 : vector<1x256xf32>
    %cst_20 = arith.constant 1.000000e+00 : f32
    %143 = vector.broadcast %cst_20 : f32 to vector<1x256xf32>
    %144 = arith.addf %143, %142 : vector<1x256xf32>
    %145 = arith.divf %143, %144 : vector<1x256xf32>
    %146 = vector.shape_cast %145 : vector<1x256xf32> to vector<1x1x256xf32>
    %147 = vector.broadcast %146 : vector<1x1x256xf32> to vector<1x48x256xf32>
    %148 = arith.mulf %0, %147 : vector<1x48x256xf32>
    %149 = arith.truncf %148 : vector<1x48x256xf32> to vector<1x48x256xbf16>
    %150 = vector.shape_cast %22 : vector<1x48xf32> to vector<1x48x1xf32>
    %151 = vector.broadcast %150 : vector<1x48x1xf32> to vector<1x48x256xf32>
    %152 = arith.mulf %0, %151 : vector<1x48x256xf32>
    %153 = arith.truncf %152 : vector<1x48x256xf32> to vector<1x48x256xbf16>
    %154 = tpu.concatenate %149, %153 in 1 : vector<1x48x256xbf16>, vector<1x48x256xbf16> -> vector<1x96x256xbf16>
    %c0_21 = arith.constant 0 : index
    %c0_22 = arith.constant 0 : index
    %155 = vector.load %arg7[%c0_21, %c0_22] : memref<48x96xbf16, #tpu.memory_space<vmem>>, vector<48x96xbf16>
    %156 = vector.shape_cast %154 : vector<1x96x256xbf16> to vector<96x256xbf16>
    %cst_23 = arith.constant dense<0.000000e+00> : vector<48x256xf32>
    %157 = tpu.matmul %155, %156, %cst_23 {dimension_numbers = #tpu.dot_dimension_numbers<[1], [0], [0], [1], [0, 0, 1, 1], [], []>} : vector<48x96xbf16>, vector<96x256xbf16>, vector<48x256xf32> -> vector<48x256xf32>
    %158 = vector.shape_cast %157 : vector<48x256xf32> to vector<1x48x256xf32>
    %159 = arith.addf %158, %0 : vector<1x48x256xf32>
    %c0_24 = arith.constant 0 : index
    %c0_25 = arith.constant 0 : index
    %c0_26 = arith.constant 0 : index
    %160 = vector.load %arg8[%c0_24, %c0_25, %c0_26] : memref<1x48x256xf32, #tpu.memory_space<vmem>>, vector<1x48x256xf32>
    tpu.vector_store %arg8[%c0_24, %c0_25, %c0_26], %159 {strides = array<i32>} : memref<1x48x256xf32, #tpu.memory_space<vmem>>, vector<1x48x256xf32>,
    return
  }
  func.func @transform_0(%arg0: i32) -> i32 {
    %c0_i32 = arith.constant 0 : i32
    %c0_i32_0 = arith.constant 0 : i32
    return %c0_i32 : i32
  }
  func.func @transform_1(%arg0: i32) -> i32 {
    %c0_i32 = arith.constant 0 : i32
    %c0_i32_0 = arith.constant 0 : i32
    return %c0_i32 : i32
  }
  func.func @transform_2(%arg0: i32) -> (i32, i32) {
    %c0_i32 = arith.constant 0 : i32
    %c0_i32_0 = arith.constant 0 : i32
    %c0_i32_1 = arith.constant 0 : i32
    return %c0_i32, %c0_i32_0 : i32, i32
  }
  func.func @transform_3(%arg0: i32) -> (i32, i32, i32) {
    %c0_i32 = arith.constant 0 : i32
    %c0_i32_0 = arith.constant 0 : i32
    %c0_i32_1 = arith.constant 0 : i32
    return %arg0, %c0_i32, %c0_i32_0 : i32, i32, i32
  }
  func.func @transform_4(%arg0: i32) -> (i32, i32) {
    %c0_i32 = arith.constant 0 : i32
    %c0_i32_0 = arith.constant 0 : i32
    %c0_i32_1 = arith.constant 0 : i32
    return %c0_i32, %c0_i32_0 : i32, i32
  }
  func.func @transform_5(%arg0: i32) -> (i32, i32) {
    %c0_i32 = arith.constant 0 : i32
    %c0_i32_0 = arith.constant 0 : i32
    %c0_i32_1 = arith.constant 0 : i32
    return %c0_i32, %c0_i32_0 : i32, i32
  }
  func.func @transform_6(%arg0: i32) -> (i32, i32) {
    %c0_i32 = arith.constant 0 : i32
    %c0_i32_0 = arith.constant 0 : i32
    %c0_i32_1 = arith.constant 0 : i32
    return %c0_i32, %c0_i32_0 : i32, i32
  }
  func.func @transform_7(%arg0: i32) -> (i32, i32, i32) {
    %c0_i32 = arith.constant 0 : i32
    %c0_i32_0 = arith.constant 0 : i32
    %c0_i32_1 = arith.constant 0 : i32
    return %arg0, %c0_i32, %c0_i32_0 : i32, i32, i32
  }
}

</mosaic_0001>

<llo_original>
// kernel: tpu_custom_call.1
$region0: #{tpu_custom_call.1}
  #allocation0 [shape = 'u32[]', space=smem, size = 0x4, offset = 0x4, fixed_abs, tag = 'smem constant byte address 0x4 - core index']
  #allocation1 [shape = 'u32[72,128]{1,0:T(1,128)}', space=vmem, size = 0x9000, scoped, tag = 'internal scratch']
  #allocation2 [shape = 'f32[1]{0:T(128)S(6)}', space=smem, size = 0x200, scoped, tag = 'scoped memory for tpu_custom_call.1']
  %s0 = inlined_call_operand.vmem [shape: f32[18], index: 0, kind: input, shape index: {}]
  %s1 = inlined_call_operand.<no memory space> [shape: f32[1], index: 1, kind: input, shape index: {}]
  %s2 = inlined_call_operand.hbm [shape: f32[9,256], index: 2, kind: input, shape index: {}]
  %s3 = inlined_call_operand.hbm [shape: f32[2,48,256], index: 3, kind: input, shape index: {}]
  %s4 = inlined_call_operand.vmem [shape: bf16[48,2], index: 4, kind: input, shape index: {}]
  %s5 = inlined_call_operand.vmem [shape: bf16[2,48], index: 5, kind: input, shape index: {}]
  %s6 = inlined_call_operand.vmem [shape: bf16[48,96], index: 6, kind: input, shape index: {}]
  %s7 = inlined_call_operand.hbm [shape: f32[2,48,256], index: 7, kind: output, shape index: {}]
  %s8 = sld [smem:[#allocation0]]
  $region73: #{tpu_custom_call.1} parent=0
    _
  %s10 = ssub.s32 1, %s8
  %s11 = scalar_select 0, %s10, %s8
  %12 = sst [smem:[#allocation2]] %s1
  $region1: #{tpu_custom_call.1} parent=0
    #allocation3 [shape = 'u8[512]{0}', space=smem, size = 0x200, scoped, tag = 'input window, operand 0, single buffered']
    #allocation4 [shape = 's32[2]{0}', space=sflag, size = 0x8, scoped, tag = 'scoped memory for tpu_custom_call.1']
    #allocation5 [shape = 's32[2]{0}', space=sflag, size = 0x8, scoped, tag = 'scoped memory for tpu_custom_call.1']
    #allocation6 [shape = 's32[2]{0}', space=sflag, size = 0x8, scoped, tag = 'scoped memory for tpu_custom_call.1']
    #allocation7 [shape = 'u8[16384]{0}', space=vmem, size = 0x4000, scoped, tag = 'input window, operand 2, single buffered']
    #allocation8 [shape = 'u8[98304]{0}', space=vmem, size = 0x18000, scoped, tag = 'input window, operand 3']
    #allocation9 [shape = 's32[2]{0}', space=sflag, size = 0x8, scoped, tag = 'scoped memory for tpu_custom_call.1']
    #allocation10 [shape = 'u8[98304]{0}', space=vmem, size = 0x18000, scoped, tag = 'output window, operand 0']
    %13 = vsyncpa [#allocation6], 0
    %14 = vsyncpa [#allocation4], 0
    %15 = vsyncpa [#allocation9], 0
    %s16 = scalar_lea.sflag [#allocation9], 1
    %17 = vsyncpa %s16, 0
    %18 = vsyncpa [#allocation5], 0
    %s19 = scalar_lea.sflag [#allocation5], 1
    %20 = vsyncpa %s19, 0
    loop: start=0, step=1, limit=4
    $region2: #{tpu_custom_call.1} parent=1 // loop_pre_header
      _
    $region3: #{tpu_custom_call.1} parent=1 // loop_header
      %s22 = sphi 0, %s26
      %p23 = scmp.ge.s32.totalorder %s22, 4
      %s30 = sphi 0, %s30
      %s32 = sphi 0, %s30
      %s33 = sphi 0, %s32
      %s47 = sphi 0, %s33
      %s51 = sphi 0, %s51
      %s53 = sphi 0, %s51
      %s54 = sphi 0, %s53
      %s68 = sphi 0, %s54
      %s72 = sphi 0, %s72
      %s74 = sphi 0, %s72
      %s75 = sphi 0, %s74
      %s89 = sphi 0, %s75
      %s95 = sphi 0, %s97
      %s98 = sphi 0, %s95
      %s99 = sphi 0, %s98
      %s115 = sphi 0, %s99
      %s119 = sphi 0, %s119
      %s121 = sphi 0, %s119
      %s122 = sphi 0, %s121
      %s136 = sphi 0, %s122
      %s140 = sphi 0, %s140
      %s142 = sphi 0, %s140
      %s143 = sphi 0, %s142
      %s157 = sphi 0, %s143
      %s161 = sphi 0, %s161
      %s163 = sphi 0, %s161
      %s164 = sphi 0, %s163
      %s178 = sphi 0, %s164
      %s184 = sphi 0, %s186
      %s187 = sphi 0, %s184
      %s188 = sphi 0, %s187
      %s204 = sphi 0, %s188
    $region4: #{tpu_custom_call.1} parent=1 // loop_header_branch
      %25 = sbr.rel (%p23) target = $region8
    $region5: #{tpu_custom_call.1} parent=1 // loop_body
      %s27 = ssub.s32 %s22, 1
      %s28 = ssub.s32 %s22, 2
      %s29 = sadd.s32 %s22, 1
      %s31 = sadd.s32 %s30, 1
      %p34 = scmp.eq.s32.totalorder %s22, 1
      %p35 = scmp.ne.s32.totalorder %s30, %s32
      %p36 = scmp.eq.s32.totalorder %s22, 0
      %p37 = por %p35, %p36
      %p38 = scmp.ne.s32.totalorder %s30, %s32
      %p39 = scmp.eq.s32.totalorder %s27, 1
      %p40 = por %p38, %p39
      %p41 = scmp.ne.s32.totalorder %s32, %s33
      %p42 = scmp.eq.s32.totalorder %s27, 0
      %p43 = por %p41, %p42
      %p44 = scmp.ne.s32.totalorder %s32, %s33
      %p45 = scmp.eq.s32.totalorder %s28, 1
      %p46 = por %p44, %p45
      %p48 = scmp.ne.s32.totalorder %s33, %s47
      %p49 = scmp.eq.s32.totalorder %s28, 0
      %p50 = por %p48, %p49
      %s52 = sadd.s32 %s51, 1
      %p55 = scmp.eq.s32.totalorder %s22, 1
      %p56 = scmp.ne.s32.totalorder %s51, %s53
      %p57 = scmp.eq.s32.totalorder %s22, 0
      %p58 = por %p56, %p57
      %p59 = scmp.ne.s32.totalorder %s51, %s53
      %p60 = scmp.eq.s32.totalorder %s27, 1
      %p61 = por %p59, %p60
      %p62 = scmp.ne.s32.totalorder %s53, %s54
      %p63 = scmp.eq.s32.totalorder %s27, 0
      %p64 = por %p62, %p63
      %p65 = scmp.ne.s32.totalorder %s53, %s54
      %p66 = scmp.eq.s32.totalorder %s28, 1
      %p67 = por %p65, %p66
      %p69 = scmp.ne.s32.totalorder %s54, %s68
      %p70 = scmp.eq.s32.totalorder %s28, 0
      %p71 = por %p69, %p70
      %s73 = sadd.s32 %s72, 1
      %p76 = scmp.eq.s32.totalorder %s22, 1
      %p77 = scmp.ne.s32.totalorder %s72, %s74
      %p78 = scmp.eq.s32.totalorder %s22, 0
      %p79 = por %p77, %p78
      %p80 = scmp.ne.s32.totalorder %s72, %s74
      %p81 = scmp.eq.s32.totalorder %s27, 1
      %p82 = por %p80, %p81
      %p83 = scmp.ne.s32.totalorder %s74, %s75
      %p84 = scmp.eq.s32.totalorder %s27, 0
      %p85 = por %p83, %p84
      %p86 = scmp.ne.s32.totalorder %s74, %s75
      %p87 = scmp.eq.s32.totalorder %s28, 1
      %p88 = por %p86, %p87
      %p90 = scmp.ne.s32.totalorder %s75, %s89
      %p91 = scmp.eq.s32.totalorder %s28, 0
      %p92 = por %p90, %p91
      %s93 = ssub.s32 %s22, %s29
      %p94 = scmp.eq.s32.totalorder %s93, 0
      %s96 = sadd.s32 %s95, 1
      %s97 = scalar_select %p94, %s95, %s96
      %p100 = pneg %p94
      %p101 = scmp.eq.s32.totalorder %s22, 1
      %p102 = por %p100, %p101
      %p103 = scmp.ne.s32.totalorder %s95, %s98
      %p104 = scmp.eq.s32.totalorder %s22, 0
      %p105 = por %p103, %p104
      %p106 = scmp.ne.s32.totalorder %s95, %s98
      %p107 = scmp.eq.s32.totalorder %s27, 1
      %p108 = por %p106, %p107
      %p109 = scmp.ne.s32.totalorder %s98, %s99
      %p110 = scmp.eq.s32.totalorder %s27, 0
      %p111 = por %p109, %p110
      %p112 = scmp.ne.s32.totalorder %s98, %s99
      %p113 = scmp.eq.s32.totalorder %s28, 1
      %p114 = por %p112, %p113
      %p116 = scmp.ne.s32.totalorder %s99, %s115
      %p117 = scmp.eq.s32.totalorder %s28, 0
      %p118 = por %p116, %p117
      %s120 = sadd.s32 %s119, 1
      %p123 = scmp.eq.s32.totalorder %s22, 1
      %p124 = scmp.ne.s32.totalorder %s119, %s121
      %p125 = scmp.eq.s32.totalorder %s22, 0
      %p126 = por %p124, %p125
      %p127 = scmp.ne.s32.totalorder %s119, %s121
      %p128 = scmp.eq.s32.totalorder %s27, 1
      %p129 = por %p127, %p128
      %p130 = scmp.ne.s32.totalorder %s121, %s122
      %p131 = scmp.eq.s32.totalorder %s27, 0
      %p132 = por %p130, %p131
      %p133 = scmp.ne.s32.totalorder %s121, %s122
      %p134 = scmp.eq.s32.totalorder %s28, 1
      %p135 = por %p133, %p134
      %p137 = scmp.ne.s32.totalorder %s122, %s136
      %p138 = scmp.eq.s32.totalorder %s28, 0
      %p139 = por %p137, %p138
      %s141 = sadd.s32 %s140, 1
      %p144 = scmp.eq.s32.totalorder %s22, 1
      %p145 = scmp.ne.s32.totalorder %s140, %s142
      %p146 = scmp.eq.s32.totalorder %s22, 0
      %p147 = por %p145, %p146
      %p148 = scmp.ne.s32.totalorder %s140, %s142
      %p149 = scmp.eq.s32.totalorder %s27, 1
      %p150 = por %p148, %p149
      %p151 = scmp.ne.s32.totalorder %s142, %s143
      %p152 = scmp.eq.s32.totalorder %s27, 0
      %p153 = por %p151, %p152
      %p154 = scmp.ne.s32.totalorder %s142, %s143
      %p155 = scmp.eq.s32.totalorder %s28, 1
      %p156 = por %p154, %p155
      %p158 = scmp.ne.s32.totalorder %s143, %s157
      %p159 = scmp.eq.s32.totalorder %s28, 0
      %p160 = por %p158, %p159
      %s162 = sadd.s32 %s161, 1
      %p165 = scmp.eq.s32.totalorder %s22, 1
      %p166 = scmp.ne.s32.totalorder %s161, %s163
      %p167 = scmp.eq.s32.totalorder %s22, 0
      %p168 = por %p166, %p167
      %p169 = scmp.ne.s32.totalorder %s161, %s163
      %p170 = scmp.eq.s32.totalorder %s27, 1
      %p171 = por %p169, %p170
      %p172 = scmp.ne.s32.totalorder %s163, %s164
      %p173 = scmp.eq.s32.totalorder %s27, 0
      %p174 = por %p172, %p173
      %p175 = scmp.ne.s32.totalorder %s163, %s164
      %p176 = scmp.eq.s32.totalorder %s28, 1
      %p177 = por %p175, %p176
      %p179 = scmp.ne.s32.totalorder %s164, %s178
      %p180 = scmp.eq.s32.totalorder %s28, 0
      %p181 = por %p179, %p180
      %s182 = ssub.s32 %s22, %s29
      %p183 = scmp.eq.s32.totalorder %s182, 0
      %s185 = sadd.s32 %s184, 1
      %s186 = scalar_select %p183, %s184, %s185
      %p189 = pneg %p183
      %p190 = scmp.eq.s32.totalorder %s22, 1
      %p191 = por %p189, %p190
      %p192 = scmp.ne.s32.totalorder %s184, %s187
      %p193 = scmp.eq.s32.totalorder %s22, 0
      %p194 = por %p192, %p193
      %p195 = scmp.ne.s32.totalorder %s184, %s187
      %p196 = scmp.eq.s32.totalorder %s27, 1
      %p197 = por %p195, %p196
      %p198 = scmp.ne.s32.totalorder %s187, %s188
      %p199 = scmp.eq.s32.totalorder %s27, 0
      %p200 = por %p198, %p199
      %p201 = scmp.ne.s32.totalorder %s187, %s188
      %p202 = scmp.eq.s32.totalorder %s28, 1
      %p203 = por %p201, %p202
      %p205 = scmp.ne.s32.totalorder %s188, %s204
      %p206 = scmp.eq.s32.totalorder %s28, 0
      %p207 = por %p205, %p206
      %p208 = scmp.le.s32.totalorder 1, %s22
      %p209 = scmp.lt.s32.totalorder %s22, 3
      %p210 = pnand %p208, %p209
      %p211 = pneg %p210
      // Predicated region
      $region9: #{tpu_custom_call.1} parent=5 // pred_check
        _
      $region10: #{tpu_custom_call.1} parent=5 // pred_check_branch
        %213 = sbr.rel (%p210) target = $region12
      $region11: #{tpu_custom_call.1} parent=5 // pred_region
        %s214 = ssub.s32 %s22, 1
        // Predicated region
        $region13: #{tpu_custom_call.1} parent=11 // pred_check
          %p215 = pneg %p43
        $region14: #{tpu_custom_call.1} parent=11 // pred_check_branch
          %217 = sbr.rel (%p215) target = $region16
        $region15: #{tpu_custom_call.1} parent=11 // pred_region
          %219 = vsyncadd [#allocation6], 0
          %s221 = sshll.u32 %s0, 4
          %s222 = int_to_ptr.vmem [resolvable:$true] %s221
          %224 = dma.vmem_to_smem %s222, 16, [#allocation3], [#allocation6]
        $region16: #{tpu_custom_call.1} parent=11 // pred_fallthru
          _
        // Predicated region
        $region17: #{tpu_custom_call.1} parent=11 // pred_check
          %p225 = pneg %p64
        $region18: #{tpu_custom_call.1} parent=11 // pred_check_branch
          %227 = sbr.rel (%p225) target = $region20
        $region19: #{tpu_custom_call.1} parent=11 // pred_region
          _
        $region20: #{tpu_custom_call.1} parent=11 // pred_fallthru
          _
        // Predicated region
        $region21: #{tpu_custom_call.1} parent=11 // pred_check
          %p228 = pneg %p85
        $region22: #{tpu_custom_call.1} parent=11 // pred_check_branch
          %230 = sbr.rel (%p228) target = $region24
        $region23: #{tpu_custom_call.1} parent=11 // pred_region
          %232 = vsyncadd [#allocation4], 0
          %s233 = sshll.u32 %s2, 4
          %s234 = int_to_ptr.hbm [resolvable:$true] %s233
          %s235 = sshll.u32 [#allocation7], 4
          %s236 = int_to_ptr.vmem [resolvable:$true] %s235
          %241 = dma.hbm_to_vmem [thread:$0]  %s234, 512, %s236, [#allocation4], 256, 256, 16
        $region24: #{tpu_custom_call.1} parent=11 // pred_fallthru
          _
        // Predicated region
        $region25: #{tpu_custom_call.1} parent=11 // pred_check
          %p242 = pneg %p132
        $region26: #{tpu_custom_call.1} parent=11 // pred_check_branch
          %244 = sbr.rel (%p242) target = $region28
        $region27: #{tpu_custom_call.1} parent=11 // pred_region
          _
        $region28: #{tpu_custom_call.1} parent=11 // pred_fallthru
          _
        // Predicated region
        $region29: #{tpu_custom_call.1} parent=11 // pred_check
          %p245 = pneg %p153
        $region30: #{tpu_custom_call.1} parent=11 // pred_check_branch
          %247 = sbr.rel (%p245) target = $region32
        $region31: #{tpu_custom_call.1} parent=11 // pred_region
          _
        $region32: #{tpu_custom_call.1} parent=11 // pred_fallthru
          _
        // Predicated region
        $region33: #{tpu_custom_call.1} parent=11 // pred_check
          %p248 = pneg %p174
        $region34: #{tpu_custom_call.1} parent=11 // pred_check_branch
          %250 = sbr.rel (%p248) target = $region36
        $region35: #{tpu_custom_call.1} parent=11 // pred_region
          _
        $region36: #{tpu_custom_call.1} parent=11 // pred_fallthru
          _
      $region12: #{tpu_custom_call.1} parent=5 // pred_fallthru
        _
      %p251 = scmp.lt.s32.totalorder %s22, 2
      // Predicated region
      $region37: #{tpu_custom_call.1} parent=5 // pred_check
        %p252 = pneg %p251
      $region38: #{tpu_custom_call.1} parent=5 // pred_check_branch
        %254 = sbr.rel (%p252) target = $region40
      $region39: #{tpu_custom_call.1} parent=5 // pred_region
        // Predicated region
        $region41: #{tpu_custom_call.1} parent=39 // pred_check
          %p255 = pneg %p105
        $region42: #{tpu_custom_call.1} parent=39 // pred_check_branch
          %257 = sbr.rel (%p255) target = $region44
        $region43: #{tpu_custom_call.1} parent=39 // pred_region
          %s258 = sand.u32 %s95, 1
          %s259 = scalar_lea.sflag [#allocation9], %s258
          %s260 = sand.u32 %s95, 1
          %s261 = smul.addr %s260, 96
          %s262 = scalar_lea.vmem [#allocation8], %s261
          %264 = vsyncadd %s259, 0
          %s265 = smul.addr %s22, 12
          %s266 = smul.addr %s265, 8
          %s267 = scalar_lea.hbm %s3, %s266
          %s268 = sshll.u32 %s267, 4
          %s269 = int_to_ptr.hbm [resolvable:$true] %s268
          %s270 = sshll.u32 %s262, 4
          %s271 = int_to_ptr.vmem [resolvable:$true] %s270
          %276 = dma.hbm_to_vmem [thread:$0]  %s269, 1536, %s271, %s259, 256, 256, 16
        $region44: #{tpu_custom_call.1} parent=39 // pred_fallthru
          _
      $region40: #{tpu_custom_call.1} parent=5 // pred_fallthru
        _
      %p277 = scmp.le.s32.totalorder 1, %s22
      %p278 = scmp.lt.s32.totalorder %s22, 3
      %p279 = pnand %p277, %p278
      %p280 = pneg %p279
      // Predicated region
      $region45: #{tpu_custom_call.1} parent=5 // pred_check
        _
      $region46: #{tpu_custom_call.1} parent=5 // pred_check_branch
        %282 = sbr.rel (%p279) target = $region48
      $region47: #{tpu_custom_call.1} parent=5 // pred_region
        %s283 = ssub.s32 %s22, 1
        // Predicated region
        $region49: #{tpu_custom_call.1} parent=47 // pred_check
          %p284 = pneg %p43
        $region50: #{tpu_custom_call.1} parent=47 // pred_check_branch
          %286 = sbr.rel (%p284) target = $region52
        $region51: #{tpu_custom_call.1} parent=47 // pred_region
          %288 = dma.done [#allocation6], 16
        $region52: #{tpu_custom_call.1} parent=47 // pred_fallthru
          _
        // Predicated region
        $region53: #{tpu_custom_call.1} parent=47 // pred_check
          %p289 = pneg %p85
        $region54: #{tpu_custom_call.1} parent=47 // pred_check_branch
          %291 = sbr.rel (%p289) target = $region56
        $region55: #{tpu_custom_call.1} parent=47 // pred_region
          %293 = dma.done [#allocation4], 512
        $region56: #{tpu_custom_call.1} parent=47 // pred_fallthru
          _
        %s294 = sand.u32 %s98, 1
        %s295 = scalar_lea.sflag [#allocation9], %s294
        %s296 = sand.u32 %s98, 1
        %s297 = smul.addr %s296, 96
        %s298 = scalar_lea.vmem [#allocation8], %s297
        // Predicated region
        $region57: #{tpu_custom_call.1} parent=47 // pred_check
          %p299 = pneg %p111
        $region58: #{tpu_custom_call.1} parent=47 // pred_check_branch
          %301 = sbr.rel (%p299) target = $region60
        $region59: #{tpu_custom_call.1} parent=47 // pred_region
          %303 = dma.done %s295, 1536
        $region60: #{tpu_custom_call.1} parent=47 // pred_fallthru
          _
        %304 = sfence
        %p305 = pneg %p43
        %p306 = pneg %p40
        %p307 = pneg %p64
        %p308 = pneg %p61
        %p309 = pneg %p85
        %p310 = pneg %p82
        %s311 = sand.u32 %s98, 1
        %s312 = scalar_lea.sflag [#allocation9], %s311
        %s313 = sand.u32 %s98, 1
        %s314 = smul.addr %s313, 96
        %s315 = scalar_lea.vmem [#allocation8], %s314
        %p316 = pneg %p111
        %p317 = pneg %p108
        %p318 = pneg %p132
        %p319 = pneg %p129
        %p320 = pneg %p153
        %p321 = pneg %p150
        %p322 = pneg %p174
        %p323 = pneg %p171
        %p324 = pneg %p200
        %p325 = pneg %p197
        %s326 = sand.u32 %s187, 1
        %s327 = scalar_lea.sflag [#allocation5], %s326
        %s328 = sand.u32 %s187, 1
        %s329 = smul.addr %s328, 96
        %s330 = scalar_lea.vmem [#allocation10], %s329
        %v332 = vld [vmem:[%s298] sm:$0xff]
        %v333 = vld [vmem:[%s298 + $0x8] sm:$0xff]
        %v334 = vld [vmem:[%s298 + $0x10] sm:$0xff]
        %v335 = vld [vmem:[%s298 + $0x18] sm:$0xff]
        %v336 = vld [vmem:[%s298 + $0x20] sm:$0xff]
        %v337 = vld [vmem:[%s298 + $0x28] sm:$0xff]
        %v338 = vld [vmem:[%s298 + $0x30] sm:$0xff]
        %v339 = vld [vmem:[%s298 + $0x38] sm:$0xff]
        %v340 = vld [vmem:[%s298 + $0x40] sm:$0xff]
        %v341 = vld [vmem:[%s298 + $0x48] sm:$0xff]
        %v342 = vld [vmem:[%s298 + $0x50] sm:$0xff]
        %v343 = vld [vmem:[%s298 + $0x58] sm:$0xff]
        %v344 = vadd.f32 %v332, %v333
        %345 = vadd.xlane.f32.xlu0 %v344
        %v346 = vpop.xlane.xlu0 %345
        %v347 = vadd.f32 %v334, %v335
        %348 = vadd.xlane.f32.xlu0 %v347
        %v349 = vpop.xlane.xlu0 %348
        %v350 = vadd.f32 %v336, %v337
        %351 = vadd.xlane.f32.xlu0 %v350
        %v352 = vpop.xlane.xlu0 %351
        %v353 = vadd.f32 %v338, %v339
        %354 = vadd.xlane.f32.xlu0 %v353
        %v355 = vpop.xlane.xlu0 %354
        %v356 = vadd.f32 %v340, %v341
        %357 = vadd.xlane.f32.xlu0 %v356
        %v358 = vpop.xlane.xlu0 %357
        %v359 = vadd.f32 %v342, %v343
        %360 = vadd.xlane.f32.xlu0 %v359
        %v361 = vpop.xlane.xlu0 %360
        %v362 = vrcp.pop 256.0
        %v363 = vmul.f32 256.0, %v362
        %v364 = vsub.f32 1.0, %v363
        %v365 = vmul.f32 %v362, %v364
        %v366 = vadd.f32 %v362, %v365
        %vm367 = vweird.f32 %v362
        %v368 = vsel %vm367, %v362, %v366
        %v369 = vmul.f32 %v346, %v368
        %v370 = vmul.f32 %v349, %v368
        %v371 = vmul.f32 %v352, %v368
        %v372 = vmul.f32 %v355, %v368
        %v373 = vmul.f32 %v358, %v368
        %v374 = vmul.f32 %v361, %v368
        %v375 = vpack.c.bf16 %v370, %v369
        %v376 = vpack.c.bf16 %v372, %v371
        %v377 = vpack.c.bf16 %v374, %v373
        %v378 = vld [vmem:[%s4] sm:$0xf]
        %v379 = vld [vmem:[%s4 + $0x4] sm:$0xf]
        %v380 = vld [vmem:[%s4 + $0x8] sm:$0xf]
        %v381 = vld [vmem:[%s4 + $0xc] sm:$0xf]
        %v382 = vld [vmem:[%s4 + $0x10] sm:$0xf]
        %v383 = vld [vmem:[%s4 + $0x14] sm:$0xf]
        %v387 = vunpack.c.l.b16 %v375
        %v388 = vunpack.c.h.b16 %v375
        %v389 = vunpack.c.l.b16 %v376
        %v390 = vunpack.c.h.b16 %v376
        %v391 = vunpack.c.l.b16 %v377
        %v392 = vunpack.c.h.b16 %v377
        %v393 = vlaneseq
        %v394 = vand.u32 %v393, 127
        %v395 = vperm.slane %v387, %v394
        %v396 = vadd.s32 %v394, 4294967288
        %v397 = vperm.slane %v388, %v396
        %vm398 = vcmask 130112
        %v399 = vsel %vm398, %v397, %v395
        %v400 = vadd.s32 %v394, 4294967280
        %v401 = vperm.slane %v389, %v400
        %vm402 = vcmask 195712
        %v403 = vsel %vm402, %v401, %v399
        %v404 = vadd.s32 %v394, 4294967272
        %v405 = vperm.slane %v390, %v404
        %vm406 = vcmask 261312
        %v407 = vsel %vm406, %v405, %v403
        %v408 = vadd.s32 %v394, 4294967264
        %v409 = vperm.slane %v391, %v408
        %vm410 = vcmask 326912
        %v411 = vsel %vm410, %v409, %v407
        %v412 = vadd.s32 %v394, 4294967256
        %v413 = vperm.slane %v392, %v412
        %vm414 = vcmask 392512
        %v415 = vsel %vm414, %v413, %v411
        %v416 = vpack.c.b16 %v415, %v415
        %v423 = vunpack.c.l.b16 %v378
        %v424 = vunpack.c.l.b16 %v379
        %v425 = vunpack.c.l.b16 %v380
        %v426 = vunpack.c.l.b16 %v381
        %v427 = vunpack.c.l.b16 %v382
        %v428 = vunpack.c.l.b16 %v383
        %v429 = vpack.c.b16 %v424, %v423
        %v430 = vpack.c.b16 %v426, %v425
        %v431 = vpack.c.b16 %v428, %v427
        %vm435 = vcmask 392192
        %v437 = vsel %vm435, %v416, 0
        %439 = vmatpush.bf16.msra.mxu0 0
        %440 = vmatpush.bf16.msra.mxu0 0
        %441 = vmatpush.bf16.msra.mxu0 0
        %442 = vmatpush.bf16.msra.mxu0 0
        %443 = vmatpush.bf16.msra.mxu0 0
        %444 = vmatpush.bf16.msra.mxu0 %v431
        %445 = vmatpush.bf16.msra.mxu0 %v430
        %446 = vmatpush.bf16.msra.mxu0 %v429
        %447 = vmatmul.bf16.gmra.mxu0 %v437
        %v448 = vpop.f32.mrf.mxu0
        %v449 = vadd.f32 0.0, %v448
        %v450 = vpop.f32.mrf.mxu0
        %451 = vdwg.mxu0
        %s452 = sld [smem:[#allocation2]]
        %v453 = vmax.f32 %v449, 0.0
        %v454 = vmin.f32 %v449, 0.0
        %v455 = vstv %s452
        %v456 = vmul.f32 %v455, %v454
        %v457 = vadd.f32 %v453, %v456
        %v458 = vpack.c.bf16 %v457, %v457
        %v459 = vld [vmem:[%s5] sm:$0x1]
        %vm460 = vcmask 15360
        %v462 = vsel %vm460, %v458, 0
        %vm464 = vcmask 1040384
        %v466 = vsel %vm464, %v459, 0
        %468 = vmatpush.bf16.msra.mxu0 0
        %469 = vmatpush.bf16.msra.mxu0 0
        %470 = vmatpush.bf16.msra.mxu0 0
        %471 = vmatpush.bf16.msra.mxu0 0
        %472 = vmatpush.bf16.msra.mxu0 0
        %473 = vmatpush.bf16.msra.mxu0 0
        %474 = vmatpush.bf16.msra.mxu0 0
        %475 = vmatpush.bf16.msra.mxu0 %v466
        %476 = vmatmul.bf16.gmra.mxu0 %v462
        %v477 = vpop.f32.mrf.mxu0
        %v478 = vadd.f32 0.0, %v477
        %v479 = vpop.f32.mrf.mxu0
        %480 = vdwg.mxu0
        %v481 = vxor.u32 %v478, 2147483648
        %v482 = vmul.f32 %v481, 1.442695
        %v483 = vpow.pop %v482
        %v484 = vadd.f32 %v483, 1.0
        %v485 = vrcp.pop %v484
        %v486 = vmul.f32 %v484, %v485
        %v487 = vsub.f32 1.0, %v486
        %v488 = vmul.f32 %v485, %v487
        %v489 = vadd.f32 %v485, %v488
        %vm490 = vweird.f32 %v484
        %vm491 = vweird.f32 %v485
        %vm492 = vmor %vm490, %vm491
        %v493 = vsel %vm492, %v485, %v489
        %v494 = vand.u32 2147483647, %v484
        %vm495 = vcmp.eq.f32.partialorder %v494, 8.507059e+37
        %v496 = vand.u32 %v484, 2147483648
        %v497 = vor.u32 1.1754944e-38, %v496
        %v498 = vsel %vm495, %v497, %v493
        %v499 = vmul.f32 1.0, %v498
        %v500 = vmax.f32 %v332, %v336
        %v501 = vmax.f32 %v334, %v338
        %v502 = vmax.f32 %v500, %v340
        %v503 = vmax.f32 %v501, %v342
        %v504 = vmax.f32 %v502, %v503
        %v505 = vrot.slane %v504, 4
        %v506 = vmax.f32 %v504, %v505
        %v507 = vrot.slane %v506, 2
        %v508 = vmax.f32 %v506, %v507
        %v509 = vrot.slane %v508, 1
        %v510 = vmax.f32 %v508, %v509
        %v511 = vmax.f32 %v333, %v337
        %v512 = vmax.f32 %v335, %v339
        %v513 = vmax.f32 %v511, %v341
        %v514 = vmax.f32 %v512, %v343
        %v515 = vmax.f32 %v513, %v514
        %v516 = vrot.slane %v515, 4
        %v517 = vmax.f32 %v515, %v516
        %v518 = vrot.slane %v517, 2
        %v519 = vmax.f32 %v517, %v518
        %v520 = vrot.slane %v519, 1
        %v521 = vmax.f32 %v519, %v520
        %v522 = vadd.f32 %v332, %v334
        %v523 = vadd.f32 %v522, %v336
        %v524 = vadd.f32 %v523, %v338
        %v525 = vadd.f32 %v524, %v340
        %v526 = vadd.f32 %v525, %v342
        %v527 = vrot.slane %v526, 4
        %v528 = vadd.f32 %v526, %v527
        %v529 = vrot.slane %v528, 2
        %v530 = vadd.f32 %v528, %v529
        %v531 = vrot.slane %v530, 1
        %v532 = vadd.f32 %v530, %v531
        %v533 = vadd.f32 %v333, %v335
        %v534 = vadd.f32 %v533, %v337
        %v535 = vadd.f32 %v534, %v339
        %v536 = vadd.f32 %v535, %v341
        %v537 = vadd.f32 %v536, %v343
        %v538 = vrot.slane %v537, 4
        %v539 = vadd.f32 %v537, %v538
        %v540 = vrot.slane %v539, 2
        %v541 = vadd.f32 %v539, %v540
        %v542 = vrot.slane %v541, 1
        %v543 = vadd.f32 %v541, %v542
        %v544 = vrcp.pop 48.0
        %v545 = vmul.f32 48.0, %v544
        %v546 = vsub.f32 1.0, %v545
        %v547 = vmul.f32 %v544, %v546
        %v548 = vadd.f32 %v544, %v547
        %vm549 = vweird.f32 %v544
        %v550 = vsel %vm549, %v544, %v548
        %v551 = vmul.f32 %v532, %v550
        %v552 = vmul.f32 %v543, %v550
        %v553 = vld [vmem:[#allocation7] sm:$0xff]
        %v554 = vld [vmem:[#allocation7 + $0x8] sm:$0xff]
        %v555 = vld [vmem:[#allocation7 + $0x10] sm:$0x1]
        %v556 = vld [vmem:[#allocation7 + $0x18] sm:$0x1]
        %s557 = sld [smem:[#allocation3]]
        %v558 = vstv %s557
        %v559 = vmul.f32 %v558, %v510
        %v560 = vmul.f32 %v558, %v521
        %s561 = sld [smem:[#allocation3 + $0x9]]
        %v562 = vstv %s561
        %v563 = vmul.f32 %v562, %v551
        %v564 = vmul.f32 %v562, %v552
        %v565 = vadd.f32 %v559, %v563
        %v566 = vadd.f32 %v560, %v564
        %567 = vrot.lane.b32.xlu0 %v565, 17
        %v568 = vpop.permute.xlu0 %567
        %569 = vrot.lane.b32.xlu0 %v566, 17
        %v570 = vpop.permute.xlu0 %569
        %vm571 = vcmp.lt.s32.totalorder %v394, 17
        %v572 = vsel %vm571, %v568, %v570
        %v573 = vsel %vm571, %v570, %v568
        %v574 = vmul.f32 %v573, %v553
        %v575 = vmul.f32 %v572, %v554
        %v576 = vadd.f32 %v574, 0.0
        %v577 = vadd.f32 %v575, 0.0
        %s578 = sld [smem:[#allocation3 + $0x1]]
        %v579 = vstv %s578
        %v580 = vmul.f32 %v579, %v510
        %v581 = vmul.f32 %v579, %v521
        %s582 = sld [smem:[#allocation3 + $0xa]]
        %v583 = vstv %s582
        %v584 = vmul.f32 %v583, %v551
        %v585 = vmul.f32 %v583, %v552
        %v586 = vadd.f32 %v580, %v584
        %v587 = vadd.f32 %v581, %v585
        %588 = vrot.lane.b32.xlu0 %v586, 16
        %v589 = vpop.permute.xlu0 %588
        %590 = vrot.lane.b32.xlu0 %v587, 16
        %v591 = vpop.permute.xlu0 %590
        %vm592 = vcmp.lt.s32.totalorder %v394, 16
        %v593 = vsel %vm592, %v589, %v591
        %v594 = vsel %vm592, %v591, %v589
        %v597 = vrot.slane %v553, 1
        %v598 = vrot.slane %v554, 1
        %v601 = vmul.f32 %v594, %v597
        %v602 = vmul.f32 %v593, %v598
        %v603 = vadd.f32 %v576, %v601
        %v604 = vadd.f32 %v577, %v602
        %s605 = sld [smem:[#allocation3 + $0x2]]
        %v606 = vstv %s605
        %v607 = vmul.f32 %v606, %v510
        %v608 = vmul.f32 %v606, %v521
        %s609 = sld [smem:[#allocation3 + $0xb]]
        %v610 = vstv %s609
        %v611 = vmul.f32 %v610, %v551
        %v612 = vmul.f32 %v610, %v552
        %v613 = vadd.f32 %v607, %v611
        %v614 = vadd.f32 %v608, %v612
        %615 = vrot.lane.b32.xlu0 %v613, 15
        %v616 = vpop.permute.xlu0 %615
        %617 = vrot.lane.b32.xlu0 %v614, 15
        %v618 = vpop.permute.xlu0 %617
        %vm619 = vcmp.lt.s32.totalorder %v394, 15
        %v620 = vsel %vm619, %v616, %v618
        %v621 = vsel %vm619, %v618, %v616
        %v622 = vrot.slane %v553, 2
        %v623 = vrot.slane %v554, 2
        %v626 = vmul.f32 %v621, %v622
        %v627 = vmul.f32 %v620, %v623
        %v628 = vadd.f32 %v603, %v626
        %v629 = vadd.f32 %v604, %v627
        %s630 = sld [smem:[#allocation3 + $0x3]]
        %v631 = vstv %s630
        %v632 = vmul.f32 %v631, %v510
        %v633 = vmul.f32 %v631, %v521
        %s634 = sld [smem:[#allocation3 + $0xc]]
        %v635 = vstv %s634
        %v636 = vmul.f32 %v635, %v551
        %v637 = vmul.f32 %v635, %v552
        %v638 = vadd.f32 %v632, %v636
        %v639 = vadd.f32 %v633, %v637
        %640 = vrot.lane.b32.xlu0 %v638, 1
        %v641 = vpop.permute.xlu0 %640
        %642 = vrot.lane.b32.xlu0 %v639, 1
        %v643 = vpop.permute.xlu0 %642
        %vm644 = vcmp.lt.s32.totalorder %v394, 1
        %v645 = vsel %vm644, %v641, %v643
        %v646 = vsel %vm644, %v643, %v641
        %v647 = vrot.slane %v553, 3
        %v648 = vrot.slane %v554, 3
        %v651 = vmul.f32 %v646, %v647
        %v652 = vmul.f32 %v645, %v648
        %v653 = vadd.f32 %v628, %v651
        %v654 = vadd.f32 %v629, %v652
        %s655 = sld [smem:[#allocation3 + $0x4]]
        %v656 = vstv %s655
        %v657 = vmul.f32 %v656, %v510
        %v658 = vmul.f32 %v656, %v521
        %s659 = sld [smem:[#allocation3 + $0xd]]
        %v660 = vstv %s659
        %v661 = vmul.f32 %v660, %v551
        %v662 = vmul.f32 %v660, %v552
        %v663 = vadd.f32 %v657, %v661
        %v664 = vadd.f32 %v658, %v662
        %v665 = vadd.f32 %v653, %v663
        %v666 = vadd.f32 %v654, %v664
        %s667 = sld [smem:[#allocation3 + $0x5]]
        %v668 = vstv %s667
        %v669 = vmul.f32 %v668, %v510
        %v670 = vmul.f32 %v668, %v521
        %s671 = sld [smem:[#allocation3 + $0xe]]
        %v672 = vstv %s671
        %v673 = vmul.f32 %v672, %v551
        %v674 = vmul.f32 %v672, %v552
        %v675 = vadd.f32 %v669, %v673
        %v676 = vadd.f32 %v670, %v674
        %677 = vrot.lane.b32.xlu0 %v675, 127
        %v678 = vpop.permute.xlu0 %677
        %679 = vrot.lane.b32.xlu0 %v676, 127
        %v680 = vpop.permute.xlu0 %679
        %vm681 = vcmp.lt.s32.totalorder %v394, 127
        %v682 = vsel %vm681, %v678, %v680
        %v683 = vsel %vm681, %v680, %v678
        %v684 = vrot.slane %v553, 5
        %v685 = vrot.slane %v554, 5
        %v688 = vmul.f32 %v682, %v684
        %v689 = vmul.f32 %v683, %v685
        %v690 = vadd.f32 %v665, %v688
        %v691 = vadd.f32 %v666, %v689
        %s692 = sld [smem:[#allocation3 + $0x6]]
        %v693 = vstv %s692
        %v694 = vmul.f32 %v693, %v510
        %v695 = vmul.f32 %v693, %v521
        %s696 = sld [smem:[#allocation3 + $0xf]]
        %v697 = vstv %s696
        %v698 = vmul.f32 %v697, %v551
        %v699 = vmul.f32 %v697, %v552
        %v700 = vadd.f32 %v694, %v698
        %v701 = vadd.f32 %v695, %v699
        %702 = vrot.lane.b32.xlu0 %v700, 113
        %v703 = vpop.permute.xlu0 %702
        %704 = vrot.lane.b32.xlu0 %v701, 113
        %v705 = vpop.permute.xlu0 %704
        %vm706 = vcmp.lt.s32.totalorder %v394, 113
        %v707 = vsel %vm706, %v703, %v705
        %v708 = vsel %vm706, %v705, %v703
        %v709 = vrot.slane %v553, 6
        %v710 = vrot.slane %v554, 6
        %v713 = vmul.f32 %v707, %v709
        %v714 = vmul.f32 %v708, %v710
        %v715 = vadd.f32 %v690, %v713
        %v716 = vadd.f32 %v691, %v714
        %s717 = sld [smem:[#allocation3 + $0x7]]
        %v718 = vstv %s717
        %v719 = vmul.f32 %v718, %v510
        %v720 = vmul.f32 %v718, %v521
        %s721 = sld [smem:[#allocation3 + $0x10]]
        %v722 = vstv %s721
        %v723 = vmul.f32 %v722, %v551
        %v724 = vmul.f32 %v722, %v552
        %v725 = vadd.f32 %v719, %v723
        %v726 = vadd.f32 %v720, %v724
        %727 = vrot.lane.b32.xlu0 %v725, 112
        %v728 = vpop.permute.xlu0 %727
        %729 = vrot.lane.b32.xlu0 %v726, 112
        %v730 = vpop.permute.xlu0 %729
        %vm731 = vcmp.lt.s32.totalorder %v394, 112
        %v732 = vsel %vm731, %v728, %v730
        %v733 = vsel %vm731, %v730, %v728
        %v734 = vrot.slane %v553, 7
        %v735 = vrot.slane %v554, 7
        %v738 = vmul.f32 %v732, %v734
        %v739 = vmul.f32 %v733, %v735
        %v740 = vadd.f32 %v715, %v738
        %v741 = vadd.f32 %v716, %v739
        %s742 = sld [smem:[#allocation3 + $0x8]]
        %v743 = vstv %s742
        %v744 = vmul.f32 %v743, %v510
        %v745 = vmul.f32 %v743, %v521
        %s746 = sld [smem:[#allocation3 + $0x11]]
        %v747 = vstv %s746
        %v748 = vmul.f32 %v747, %v551
        %v749 = vmul.f32 %v747, %v552
        %v750 = vadd.f32 %v744, %v748
        %v751 = vadd.f32 %v745, %v749
        %752 = vrot.lane.b32.xlu0 %v750, 111
        %v753 = vpop.permute.xlu0 %752
        %754 = vrot.lane.b32.xlu0 %v751, 111
        %v755 = vpop.permute.xlu0 %754
        %vm756 = vcmp.lt.s32.totalorder %v394, 111
        %v757 = vsel %vm756, %v753, %v755
        %v758 = vsel %vm756, %v755, %v753
        %v759 = vmul.f32 %v757, %v555
        %v760 = vmul.f32 %v758, %v556
        %v761 = vadd.f32 %v740, %v759
        %v762 = vadd.f32 %v741, %v760
        %v763 = vxor.u32 %v761, 2147483648
        %v764 = vxor.u32 %v762, 2147483648
        %v765 = vmul.f32 %v763, 1.442695
        %v766 = vpow.pop %v765
        %v767 = vmul.f32 %v764, 1.442695
        %v768 = vpow.pop %v767
        %v769 = vadd.f32 %v766, 1.0
        %v770 = vadd.f32 %v768, 1.0
        %v771 = vrcp.pop %v769
        %v772 = vmul.f32 %v769, %v771
        %v773 = vsub.f32 1.0, %v772
        %v774 = vmul.f32 %v771, %v773
        %v775 = vadd.f32 %v771, %v774
        %vm776 = vweird.f32 %v769
        %vm777 = vweird.f32 %v771
        %vm778 = vmor %vm776, %vm777
        %v779 = vsel %vm778, %v771, %v775
        %v780 = vand.u32 2147483647, %v769
        %vm781 = vcmp.eq.f32.partialorder %v780, 8.507059e+37
        %v782 = vand.u32 %v769, 2147483648
        %v783 = vor.u32 1.1754944e-38, %v782
        %v784 = vsel %vm781, %v783, %v779
        %v785 = vmul.f32 1.0, %v784
        %v786 = vrcp.pop %v770
        %v787 = vmul.f32 %v770, %v786
        %v788 = vsub.f32 1.0, %v787
        %v789 = vmul.f32 %v786, %v788
        %v790 = vadd.f32 %v786, %v789
        %vm791 = vweird.f32 %v770
        %vm792 = vweird.f32 %v786
        %vm793 = vmor %vm791, %vm792
        %v794 = vsel %vm793, %v786, %v790
        %v795 = vand.u32 2147483647, %v770
        %vm796 = vcmp.eq.f32.partialorder %v795, 8.507059e+37
        %v797 = vand.u32 %v770, 2147483648
        %v798 = vor.u32 1.1754944e-38, %v797
        %v799 = vsel %vm796, %v798, %v794
        %v800 = vmul.f32 1.0, %v799
        %v801 = vperm.slane %v785, 0
        %v802 = vperm.slane %v800, 0
        %v803 = vmul.f32 %v332, %v801
        %v804 = vmul.f32 %v333, %v802
        %v805 = vmul.f32 %v334, %v801
        %v806 = vmul.f32 %v335, %v802
        %v807 = vmul.f32 %v336, %v801
        %v808 = vmul.f32 %v337, %v802
        %v809 = vmul.f32 %v338, %v801
        %v810 = vmul.f32 %v339, %v802
        %v811 = vmul.f32 %v340, %v801
        %v812 = vmul.f32 %v341, %v802
        %v813 = vmul.f32 %v342, %v801
        %v814 = vmul.f32 %v343, %v802
        %v815 = vpack.c.bf16 %v804, %v803
        %v816 = vpack.c.bf16 %v806, %v805
        %v817 = vpack.c.bf16 %v808, %v807
        %v818 = vpack.c.bf16 %v810, %v809
        %v819 = vpack.c.bf16 %v812, %v811
        %v820 = vpack.c.bf16 %v814, %v813
        %v821 = vperm.slane %v499, 0
        %v822 = vlaneseq
        %v823 = vshrl.u32 %v822, 7
        %825 = vset.pattern.permute.xlu0 %v823
        %826 = vperm.xlu0 %825, %v821
        %v827 = vpop.permute.xlu0 %826
        %v828 = vlaneseq
        %v829 = vshrl.u32 %v828, 7
        %v830 = vadd.s32 %v829, 8
        %831 = vset.pattern.permute.xlu0 %v830
        %832 = vperm.xlu0 %831, %v821
        %v833 = vpop.permute.xlu0 %832
        %v834 = vlaneseq
        %v835 = vshrl.u32 %v834, 7
        %v836 = vadd.s32 %v835, 16
        %837 = vset.pattern.permute.xlu0 %v836
        %838 = vperm.xlu0 %837, %v821
        %v839 = vpop.permute.xlu0 %838
        %v840 = vlaneseq
        %v841 = vshrl.u32 %v840, 7
        %v842 = vadd.s32 %v841, 24
        %843 = vset.pattern.permute.xlu0 %v842
        %844 = vperm.xlu0 %843, %v821
        %v845 = vpop.permute.xlu0 %844
        %v846 = vlaneseq
        %v847 = vshrl.u32 %v846, 7
        %v848 = vadd.s32 %v847, 32
        %849 = vset.pattern.permute.xlu0 %v848
        %850 = vperm.xlu0 %849, %v821
        %v851 = vpop.permute.xlu0 %850
        %v852 = vlaneseq
        %v853 = vshrl.u32 %v852, 7
        %v854 = vadd.s32 %v853, 40
        %855 = vset.pattern.permute.xlu0 %v854
        %856 = vperm.xlu0 %855, %v821
        %v857 = vpop.permute.xlu0 %856
        %v858 = vmul.f32 %v332, %v827
        %v859 = vmul.f32 %v333, %v827
        %v860 = vmul.f32 %v334, %v833
        %v861 = vmul.f32 %v335, %v833
        %v862 = vmul.f32 %v336, %v839
        %v863 = vmul.f32 %v337, %v839
        %v864 = vmul.f32 %v338, %v845
        %v865 = vmul.f32 %v339, %v845
        %v866 = vmul.f32 %v340, %v851
        %v867 = vmul.f32 %v341, %v851
        %v868 = vmul.f32 %v342, %v857
        %v869 = vmul.f32 %v343, %v857
        %v870 = vpack.c.bf16 %v859, %v858
        %v871 = vpack.c.bf16 %v861, %v860
        %v872 = vpack.c.bf16 %v863, %v862
        %v873 = vpack.c.bf16 %v865, %v864
        %v874 = vpack.c.bf16 %v867, %v866
        %v875 = vpack.c.bf16 %v869, %v868
        %v882 = vunpack.c.l.b16 %v815
        %v883 = vunpack.c.h.b16 %v815
        %v884 = vunpack.c.l.b16 %v816
        %v885 = vunpack.c.h.b16 %v816
        %v886 = vunpack.c.l.b16 %v817
        %v887 = vunpack.c.h.b16 %v817
        %v888 = vunpack.c.l.b16 %v818
        %v889 = vunpack.c.h.b16 %v818
        %v890 = vunpack.c.l.b16 %v819
        %v891 = vunpack.c.h.b16 %v819
        %v892 = vunpack.c.l.b16 %v820
        %v893 = vunpack.c.h.b16 %v820
        %v894 = vpack.c.b16 %v884, %v882
        %v895 = vpack.c.b16 %v885, %v883
        %v896 = vpack.c.b16 %v888, %v886
        %v897 = vpack.c.b16 %v889, %v887
        %v898 = vpack.c.b16 %v892, %v890
        %v899 = vpack.c.b16 %v893, %v891
        %v912 = vunpack.c.l.b16 %v870
        %v913 = vunpack.c.h.b16 %v870
        %v914 = vunpack.c.l.b16 %v871
        %v915 = vunpack.c.h.b16 %v871
        %v916 = vunpack.c.l.b16 %v872
        %v917 = vunpack.c.h.b16 %v872
        %v918 = vunpack.c.l.b16 %v873
        %v919 = vunpack.c.h.b16 %v873
        %v920 = vunpack.c.l.b16 %v874
        %v921 = vunpack.c.h.b16 %v874
        %v922 = vunpack.c.l.b16 %v875
        %v923 = vunpack.c.h.b16 %v875
        %v924 = vpack.c.b16 %v914, %v912
        %v925 = vpack.c.b16 %v915, %v913
        %v926 = vpack.c.b16 %v918, %v916
        %v927 = vpack.c.b16 %v919, %v917
        %v928 = vpack.c.b16 %v922, %v920
        %v929 = vpack.c.b16 %v923, %v921
        %v936 = vld [vmem:[%s6] sm:$0xf]
        %v937 = vld [vmem:[%s6 + $0x4] sm:$0xf]
        %v938 = vld [vmem:[%s6 + $0x8] sm:$0xf]
        %v939 = vld [vmem:[%s6 + $0xc] sm:$0xf]
        %v940 = vld [vmem:[%s6 + $0x10] sm:$0xf]
        %v941 = vld [vmem:[%s6 + $0x14] sm:$0xf]
        %v948 = vunpack.c.l.b16 %v936
        %v949 = vunpack.c.l.b16 %v937
        %v950 = vunpack.c.l.b16 %v938
        %v951 = vunpack.c.l.b16 %v939
        %v952 = vunpack.c.l.b16 %v940
        %v953 = vunpack.c.l.b16 %v941
        %v954 = vpack.c.b16 %v949, %v948
        %v955 = vpack.c.b16 %v951, %v950
        %v956 = vpack.c.b16 %v953, %v952
        %vm957 = vcmask 785408
        %v959 = vsel %vm957, %v954, 0
        %v962 = vsel %vm957, %v955, 0
        %v965 = vsel %vm957, %v956, 0
        %967 = vmatpush.bf16.msra.mxu0 0
        %968 = vmatpush.bf16.msra.mxu0 0
        %969 = vmatpush.bf16.msra.mxu0 %v928
        %970 = vmatpush.bf16.msra.mxu0 %v926
        %971 = vmatpush.bf16.msra.mxu0 %v924
        %972 = vmatpush.bf16.msra.mxu0 %v898
        %973 = vmatpush.bf16.msra.mxu0 %v896
        %974 = vmatpush.bf16.msra.mxu0 %v894
        %975 = vmatmul.bf16.gmra.mxu0 %v959
        %v976 = vpop.f32.mrf.mxu0
        %v977 = vadd.f32 0.0, %v976
        %v978 = vpop.f32.mrf.mxu0
        %v979 = vadd.f32 0.0, %v978
        %980 = vmatmul.bf16.gmra.mxu0 %v962
        %v981 = vpop.f32.mrf.mxu0
        %v982 = vadd.f32 0.0, %v981
        %v983 = vpop.f32.mrf.mxu0
        %v984 = vadd.f32 0.0, %v983
        %985 = vmatmul.bf16.gmra.mxu0 %v965
        %v986 = vpop.f32.mrf.mxu0
        %v987 = vadd.f32 0.0, %v986
        %v988 = vpop.f32.mrf.mxu0
        %v989 = vadd.f32 0.0, %v988
        %990 = vdwg.mxu0
        %991 = vmatpush.bf16.msra.mxu0 0
        %992 = vmatpush.bf16.msra.mxu0 0
        %993 = vmatpush.bf16.msra.mxu0 %v929
        %994 = vmatpush.bf16.msra.mxu0 %v927
        %995 = vmatpush.bf16.msra.mxu0 %v925
        %996 = vmatpush.bf16.msra.mxu0 %v899
        %997 = vmatpush.bf16.msra.mxu0 %v897
        %998 = vmatpush.bf16.msra.mxu0 %v895
        %999 = vmatmul.bf16.gmra.mxu0 %v959
        %v1000 = vpop.f32.mrf.mxu0
        %v1001 = vadd.f32 0.0, %v1000
        %v1002 = vpop.f32.mrf.mxu0
        %v1003 = vadd.f32 0.0, %v1002
        %1004 = vmatmul.bf16.gmra.mxu0 %v962
        %v1005 = vpop.f32.mrf.mxu0
        %v1006 = vadd.f32 0.0, %v1005
        %v1007 = vpop.f32.mrf.mxu0
        %v1008 = vadd.f32 0.0, %v1007
        %1009 = vmatmul.bf16.gmra.mxu0 %v965
        %v1010 = vpop.f32.mrf.mxu0
        %v1011 = vadd.f32 0.0, %v1010
        %v1012 = vpop.f32.mrf.mxu0
        %v1013 = vadd.f32 0.0, %v1012
        %1014 = vdwg.mxu0
        %v1015 = vadd.f32 %v977, %v332
        %v1016 = vadd.f32 %v1001, %v333
        %v1017 = vadd.f32 %v979, %v334
        %v1018 = vadd.f32 %v1003, %v335
        %v1019 = vadd.f32 %v982, %v336
        %v1020 = vadd.f32 %v1006, %v337
        %v1021 = vadd.f32 %v984, %v338
        %v1022 = vadd.f32 %v1008, %v339
        %v1023 = vadd.f32 %v987, %v340
        %v1024 = vadd.f32 %v1011, %v341
        %v1025 = vadd.f32 %v989, %v342
        %v1026 = vadd.f32 %v1013, %v343
        %1027 = vst [vmem:[%s330] sm:$0xff] %v1015
        %1028 = vst [vmem:[%s330 + $0x8] sm:$0xff] %v1016
        %1029 = vst [vmem:[%s330 + $0x10] sm:$0xff] %v1017
        %1030 = vst [vmem:[%s330 + $0x18] sm:$0xff] %v1018
        %1031 = vst [vmem:[%s330 + $0x20] sm:$0xff] %v1019
        %1032 = vst [vmem:[%s330 + $0x28] sm:$0xff] %v1020
        %1033 = vst [vmem:[%s330 + $0x30] sm:$0xff] %v1021
        %1034 = vst [vmem:[%s330 + $0x38] sm:$0xff] %v1022
        %1035 = vst [vmem:[%s330 + $0x40] sm:$0xff] %v1023
        %1036 = vst [vmem:[%s330 + $0x48] sm:$0xff] %v1024
        %1037 = vst [vmem:[%s330 + $0x50] sm:$0xff] %v1025
        %1038 = vst [vmem:[%s330 + $0x58] sm:$0xff] %v1026
        %s1039 = sand.u32 %s187, 1
        %s1040 = scalar_lea.sflag [#allocation5], %s1039
        %s1041 = sand.u32 %s187, 1
        %s1042 = smul.addr %s1041, 96
        %s1043 = scalar_lea.vmem [#allocation10], %s1042
        // Predicated region
        $region61: #{tpu_custom_call.1} parent=47 // pred_check
          %p1044 = pneg %p197
        $region62: #{tpu_custom_call.1} parent=47 // pred_check_branch
          %1046 = sbr.rel (%p1044) target = $region64
        $region63: #{tpu_custom_call.1} parent=47 // pred_region
          %1048 = vsyncadd %s1040, 0
          %s1049 = smul.addr %s27, 12
          %s1050 = smul.addr %s1049, 8
          %s1051 = scalar_lea.hbm %s7, %s1050
          %s1052 = sshll.u32 %s1043, 4
          %s1053 = int_to_ptr.vmem [resolvable:$true] %s1052
          %s1054 = sshll.u32 %s1051, 4
          %s1055 = int_to_ptr.hbm [resolvable:$true] %s1054
          %1060 = dma.vmem_to_hbm [thread:$0]  %s1053, 1536, %s1055, %s1040, 256, 256, 16
        $region64: #{tpu_custom_call.1} parent=47 // pred_fallthru
          _
      $region48: #{tpu_custom_call.1} parent=5 // pred_fallthru
        _
      %p1061 = scmp.le.s32.totalorder 2, %s22
      // Predicated region
      $region65: #{tpu_custom_call.1} parent=5 // pred_check
        %p1062 = pneg %p1061
      $region66: #{tpu_custom_call.1} parent=5 // pred_check_branch
        %1064 = sbr.rel (%p1062) target = $region68
      $region67: #{tpu_custom_call.1} parent=5 // pred_region
        %s1065 = ssub.s32 %s22, 2
        // Predicated region
        $region69: #{tpu_custom_call.1} parent=67 // pred_check
          %p1066 = pneg %p203
        $region70: #{tpu_custom_call.1} parent=67 // pred_check_branch
          %1068 = sbr.rel (%p1066) target = $region72
        $region71: #{tpu_custom_call.1} parent=67 // pred_region
          %s1069 = sand.u32 %s188, 1
          %s1070 = scalar_lea.sflag [#allocation5], %s1069
          %s1071 = sand.u32 %s188, 1
          %s1072 = smul.addr %s1071, 96
          %s1073 = scalar_lea.vmem [#allocation10], %s1072
          %1075 = dma.done %s1070, 1536
        $region72: #{tpu_custom_call.1} parent=67 // pred_fallthru
          _
      $region68: #{tpu_custom_call.1} parent=5 // pred_fallthru
        _
    $region6: #{tpu_custom_call.1} parent=1 // loop_footer
      %s26 = sadd.s32 1, %s22
    $region7: #{tpu_custom_call.1} parent=1 // loop_footer_branch
      %21 = sbr.rel target = $region3
    $region8: #{tpu_custom_call.1} parent=1 // loop_exit
      _
    %1076 = vsyncpa [#allocation4], 1
    %s1077 = scalar_lea.sflag [#allocation4], 1
    %1078 = vsyncpa %s1077, 1
    %1079 = vsyncpa [#allocation9], 1
    %s1080 = scalar_lea.sflag [#allocation9], 1
    %1081 = vsyncpa %s1080, 1
    %1082 = vsyncpa [#allocation5], 1
    %s1083 = scalar_lea.sflag [#allocation5], 1
    %1084 = vsyncpa %s1083, 1
    %1085 = vsyncpa [#allocation6], 1
    %s1086 = scalar_lea.sflag [#allocation6], 1
    %1087 = vsyncpa %s1086, 1

</llo_original>
